<compile_context>
chip_gen: v5e
topology: v5e:2x2
jax: 0.10.0
libtpu: 0.0.40
codegen_flags: <defaults>
</compile_context>

<pallas_src>
import functools
import math

import jax
import jax.numpy as jnp
from jax.experimental import pallas as pl
from jax.experimental.pallas import tpu as pltpu


HIDDEN = 128          # hidden width (matches the PyTorch module)
PAD_OUT = 128         # lane-dense width for the padded last-layer weight/output
SUBLANE = 8           # f32 sublane tile
MAX_TILE_M = 1024     # large batch tile: single-TC chips favor one grid step
CHUNK_M = 256         # rows per independent compute chain inside the body


def _round_up(x, m):
    return ((x + m - 1) // m) * m


def _tensorcores_per_chip():
    """2 on v7x (two TensorCores per chip), 1 on v5e/v6e."""
    try:
        kind = jax.devices()[0].device_kind.lower()
    except Exception:
        return 1
    return 2 if ("v7" in kind or "7x" in kind) else 1


def _dqn_kernel(x_ref, w1_ref, b1_ref, w2_ref, b2_ref, w3_ref, b3_ref, o_ref):
    tile_m = x_ref.shape[0]

    # Hoist weight/bias loads out of the (statically unrolled) chunk loop.
    w1 = w1_ref[...]
    b1 = b1_ref[...]
    w2 = w2_ref[...]
    b2 = b2_ref[...]
    w3 = w3_ref[...]
    b3 = b3_ref[...]

    # Independent row sub-chunks -> one big basic block the scheduler can
    # interleave (chunk j+1 layer-1 matmul overlaps chunk j epilogue).
    n_chunks = max(1, (tile_m + CHUNK_M - 1) // CHUNK_M)
    for j in range(n_chunks):
        start = j * CHUNK_M
        size = min(CHUNK_M, tile_m - start)
        rows = pl.ds(start, size)

        # Layer 1: bf16 operands on the MXU (K = n_obs is tiny; Mosaic pads
        # it internally), f32 accumulation, f32 bias/ReLU epilogue.
        xb = x_ref[rows, :].astype(jnp.bfloat16)
        h1 = jnp.dot(xb, w1, preferred_element_type=jnp.float32)
        h1 = jnp.maximum(h1 + b1, 0.0)
        # Layer 2
        h2 = jnp.dot(h1.astype(jnp.bfloat16), w2,
                     preferred_element_type=jnp.float32)
        h2 = jnp.maximum(h2 + b2, 0.0)
        # Layer 3: padded to PAD_OUT columns -> lane-dense 128-wide store.
        q = jnp.dot(h2.astype(jnp.bfloat16), w3,
                    preferred_element_type=jnp.float32) + b3
        o_ref[rows, :] = q


@functools.partial(jax.jit, static_argnames=("n_actions",))
def dqn_forward(x, kernel_params, n_actions):
    """x: (B, n_observations) f32 -> (B, n_actions) f32 Q-values."""
    w1, b1, w2, b2, w3, b3 = kernel_params
    B, n_obs = x.shape
    assert w1.shape[0] == n_obs

    # Batch tiling.  v5e/v6e (1 TC): one big tile if it fits (each extra grid
    # step is pure overhead).  v7x (2 TCs): for non-tiny batches force an even
    # number of tiles so the CORE_PARALLEL batch axis gives each core a tile.
    n_cores = _tensorcores_per_chip()
    if n_cores > 1 and B >= 64:
        n_tiles = _round_up(max(n_cores, pl.cdiv(B, MAX_TILE_M)), n_cores)
    else:
        n_tiles = max(1, pl.cdiv(B, MAX_TILE_M))
    tile_m = min(MAX_TILE_M, _round_up(pl.cdiv(B, n_tiles), SUBLANE))
    grid = (pl.cdiv(B, tile_m),)

    if n_cores > 1 and grid[0] % n_cores == 0:
        dim_sem = (getattr(pltpu, "CORE_PARALLEL", "parallel"),)
    else:
        dim_sem = ("parallel",)

    flops = 2 * B * (n_obs * HIDDEN + HIDDEN * HIDDEN + HIDDEN * PAD_OUT)
    bytes_accessed = (x.size * 4
                      + (w1.size + w2.size + w3.size) * 2
                      + (b1.size + b2.size + b3.size) * 4
                      + B * PAD_OUT * 4)

    const = lambda i: (0, 0)  # weights/biases stay VMEM-resident, no re-DMA
    # NOTE: pipeline_mode=pl.Buffered(1) on the constant-index weight specs
    # would drop their second (~70 KB) buffer; skipped intentionally -- VMEM
    # is <1% utilized here and the default double-buffer is harmless.
    out = pl.pallas_call(
        _dqn_kernel,
        out_shape=jax.ShapeDtypeStruct((B, PAD_OUT), jnp.float32),
        grid=grid,
        in_specs=[
            # x passed UNPADDED: last dim equals the full array dim (legal);
            # avoids a wrapper-side pad / extra HBM round-trip over x.
            pl.BlockSpec((tile_m, n_obs), lambda i: (i, 0)),   # x tile (f32)
            pl.BlockSpec((n_obs, HIDDEN), const),              # w1 (bf16)
            pl.BlockSpec((1, HIDDEN), const),                  # b1 (f32)
            pl.BlockSpec((HIDDEN, HIDDEN), const),             # w2 (bf16)
            pl.BlockSpec((1, HIDDEN), const),                  # b2 (f32)
            pl.BlockSpec((HIDDEN, PAD_OUT), const),            # w3 padded (bf16)
            pl.BlockSpec((1, PAD_OUT), const),                 # b3 padded (f32)
        ],
        # Lane-dense 128-wide output block: unmasked vst, dense output DMA.
        out_specs=pl.BlockSpec((tile_m, PAD_OUT), lambda i: (i, 0)),
        compiler_params=pltpu.CompilerParams(dimension_semantics=dim_sem),
        cost_estimate=pl.CostEstimate(flops=flops, transcendentals=0,
                                      bytes_accessed=bytes_accessed),
    )(x, w1, b1, w2, b2, w3, b3)
    # Only the first n_actions columns are real; slicing here (inside the same
    # jit) keeps the kernel's store lane-dense.
    return out[:, :n_actions]


def init_dqn_params(key, n_observations, n_actions):
    """f32 params matching nn.Linear's U(-1/sqrt(fan_in), 1/sqrt(fan_in)) init.

    Weights stored as (in_features, out_features) (already transposed)."""
    keys = jax.random.split(key, 6)

    def linear(kw, kb, fan_in, fan_out):
        bound = 1.0 / math.sqrt(fan_in)
        w = jax.random.uniform(kw, (fan_in, fan_out), jnp.float32, -bound, bound)
        b = jax.random.uniform(kb, (fan_out,), jnp.float32, -bound, bound)
        return w, b

    w1, b1 = linear(keys[0], keys[1], n_observations, HIDDEN)
    w2, b2 = linear(keys[2], keys[3], HIDDEN, HIDDEN)
    w3, b3 = linear(keys[4], keys[5], HIDDEN, n_actions)
    return (w1, b1, w2, b2, w3, b3)


def prepare_kernel_params(params):
    """One-time (hoisted) preprocessing: pad the output dim to 128 lanes and
    cast weights to bf16 for the MXU.  Run once per parameter update."""
    w1, b1, w2, b2, w3, b3 = params
    n_actions = w3.shape[1]
    assert n_actions <= PAD_OUT

    w3p = jnp.zeros((HIDDEN, PAD_OUT), jnp.float32).at[:, :n_actions].set(w3)
    b3p = jnp.zeros((PAD_OUT,), jnp.float32).at[:n_actions].set(b3)

    return (w1.astype(jnp.bfloat16),
            b1.reshape(1, HIDDEN).astype(jnp.float32),
            w2.astype(jnp.bfloat16),
            b2.reshape(1, HIDDEN).astype(jnp.float32),
            w3p.astype(jnp.bfloat16),
            b3p.reshape(1, PAD_OUT).astype(jnp.float32))


def _ref_forward(x, kernel_params, n_actions):
    """Pure-JAX reference with the same bf16 weight/activation rounding."""
    w1, b1, w2, b2, w3, b3 = kernel_params
    f32 = lambda a: a.astype(jnp.float32)
    h = jnp.maximum(f32(x.astype(jnp.bfloat16)) @ f32(w1) + b1, 0.0)
    h = jnp.maximum(f32(h.astype(jnp.bfloat16)) @ f32(w2) + b2, 0.0)
    q = f32(h.astype(jnp.bfloat16)) @ f32(w3) + b3
    return q[:, :n_actions]


if __name__ == "__main__":
    # CartPole-v1: observation dim = 4, action dim = 2.
    n_observations, n_actions = 4, 2

    key = jax.random.PRNGKey(0)
    k_params, k_small, k_large = jax.random.split(key, 3)

    params = init_dqn_params(k_params, n_observations, n_actions)
    kparams = prepare_kernel_params(params)   # hoisted out of the hot path

    # Small "acting" batch (single grid step, single sub-chunk).
    x_small = jax.random.normal(k_small, (8, n_observations), jnp.float32)
    q_small = jax.block_until_ready(dqn_forward(x_small, kparams, n_actions))
    assert q_small.shape == (8, n_actions)
    ref_small = _ref_forward(x_small, kparams, n_actions)
    assert jnp.allclose(q_small, ref_small, atol=2e-3, rtol=2e-3)

    # Larger "training" batch (one 512-row tile on v5e/v6e, 2x256 on v7x).
    x_large = jax.random.normal(k_large, (512, n_observations), jnp.float32)
    q_large = jax.block_until_ready(dqn_forward(x_large, kparams, n_actions))
    assert q_large.shape == (512, n_actions)
    ref_large = _ref_forward(x_large, kparams, n_actions)
    assert jnp.allclose(q_large, ref_large, atol=2e-3, rtol=2e-3)

    print("KERNEL_OK")
</pallas_src>

<mosaic_0001>
module attributes {stable_mosaic.version = 11 : i64} {
  func.func @_dqn_kernel(%arg0: i32, %arg1: memref<8x4xf32, #tpu.memory_space<vmem>>, %arg2: memref<4x128xbf16, #tpu.memory_space<vmem>>, %arg3: memref<1x128xf32, #tpu.memory_space<vmem>>, %arg4: memref<128x128xbf16, #tpu.memory_space<vmem>>, %arg5: memref<1x128xf32, #tpu.memory_space<vmem>>, %arg6: memref<128x128xbf16, #tpu.memory_space<vmem>>, %arg7: memref<1x128xf32, #tpu.memory_space<vmem>>, %arg8: memref<8x128xf32, #tpu.memory_space<vmem>>) attributes {dimension_semantics = [#tpu.dimension_semantics<parallel>], iteration_bounds = array<i64: 1>, scalar_prefetch = 0 : i64, scratch_operands = 0 : i64, tpu.core_type = #tpu.core_type<tc>, window_params = [{transform_indices = @transform_0, window_bounds = array<i64: 8, 4>}, {pipeline_mode = #tpu.pipeline_mode<synchronous>, transform_indices = @transform_1, window_bounds = array<i64: 4, 128>}, {pipeline_mode = #tpu.pipeline_mode<synchronous>, transform_indices = @transform_2, window_bounds = array<i64: 1, 128>}, {pipeline_mode = #tpu.pipeline_mode<synchronous>, transform_indices = @transform_3, window_bounds = array<i64: 128, 128>}, {pipeline_mode = #tpu.pipeline_mode<synchronous>, transform_indices = @transform_4, window_bounds = array<i64: 1, 128>}, {pipeline_mode = #tpu.pipeline_mode<synchronous>, transform_indices = @transform_5, window_bounds = array<i64: 128, 128>}, {pipeline_mode = #tpu.pipeline_mode<synchronous>, transform_indices = @transform_6, window_bounds = array<i64: 1, 128>}, {transform_indices = @transform_7, window_bounds = array<i64: 8, 128>}]} {
    %c0 = arith.constant 0 : index
    %c0_0 = arith.constant 0 : index
    %0 = vector.load %arg2[%c0, %c0_0] : memref<4x128xbf16, #tpu.memory_space<vmem>>, vector<4x128xbf16>
    %c0_1 = arith.constant 0 : index
    %c0_2 = arith.constant 0 : index
    %1 = vector.load %arg3[%c0_1, %c0_2] : memref<1x128xf32, #tpu.memory_space<vmem>>, vector<1x128xf32>
    %c0_3 = arith.constant 0 : index
    %c0_4 = arith.constant 0 : index
    %2 = vector.load %arg4[%c0_3, %c0_4] : memref<128x128xbf16, #tpu.memory_space<vmem>>, vector<128x128xbf16>
    %c0_5 = arith.constant 0 : index
    %c0_6 = arith.constant 0 : index
    %3 = vector.load %arg5[%c0_5, %c0_6] : memref<1x128xf32, #tpu.memory_space<vmem>>, vector<1x128xf32>
    %c0_7 = arith.constant 0 : index
    %c0_8 = arith.constant 0 : index
    %4 = vector.load %arg6[%c0_7, %c0_8] : memref<128x128xbf16, #tpu.memory_space<vmem>>, vector<128x128xbf16>
    %c0_9 = arith.constant 0 : index
    %c0_10 = arith.constant 0 : index
    %5 = vector.load %arg7[%c0_9, %c0_10] : memref<1x128xf32, #tpu.memory_space<vmem>>, vector<1x128xf32>
    %c0_11 = arith.constant 0 : index
    %c0_12 = arith.constant 0 : index
    %6 = vector.load %arg1[%c0_11, %c0_12] : memref<8x4xf32, #tpu.memory_space<vmem>>, vector<8x4xf32>
    %7 = arith.truncf %6 : vector<8x4xf32> to vector<8x4xbf16>
    %cst = arith.constant dense<0.000000e+00> : vector<8x128xf32>
    %8 = tpu.matmul %7, %0, %cst {dimension_numbers = #tpu.dot_dimension_numbers<[1], [0], [0], [1], [0, 0, 1, 1], [], []>} : vector<8x4xbf16>, vector<4x128xbf16>, vector<8x128xf32> -> vector<8x128xf32>
    %9 = vector.broadcast %1 : vector<1x128xf32> to vector<8x128xf32>
    %10 = arith.addf %8, %9 : vector<8x128xf32>
    %cst_13 = arith.constant 0.000000e+00 : f32
    %11 = vector.broadcast %cst_13 : f32 to vector<8x128xf32>
    %12 = arith.maximumf %10, %11 : vector<8x128xf32>
    %13 = arith.truncf %12 : vector<8x128xf32> to vector<8x128xbf16>
    %cst_14 = arith.constant dense<0.000000e+00> : vector<8x128xf32>
    %14 = tpu.matmul %13, %2, %cst_14 {dimension_numbers = #tpu.dot_dimension_numbers<[1], [0], [0], [1], [0, 0, 1, 1], [], []>} : vector<8x128xbf16>, vector<128x128xbf16>, vector<8x128xf32> -> vector<8x128xf32>
    %15 = vector.broadcast %3 : vector<1x128xf32> to vector<8x128xf32>
    %16 = arith.addf %14, %15 : vector<8x128xf32>
    %cst_15 = arith.constant 0.000000e+00 : f32
    %17 = vector.broadcast %cst_15 : f32 to vector<8x128xf32>
    %18 = arith.maximumf %16, %17 : vector<8x128xf32>
    %19 = arith.truncf %18 : vector<8x128xf32> to vector<8x128xbf16>
    %cst_16 = arith.constant dense<0.000000e+00> : vector<8x128xf32>
    %20 = tpu.matmul %19, %4, %cst_16 {dimension_numbers = #tpu.dot_dimension_numbers<[1], [0], [0], [1], [0, 0, 1, 1], [], []>} : vector<8x128xbf16>, vector<128x128xbf16>, vector<8x128xf32> -> vector<8x128xf32>
    %21 = vector.broadcast %5 : vector<1x128xf32> to vector<8x128xf32>
    %22 = arith.addf %20, %21 : vector<8x128xf32>
    %c0_17 = arith.constant 0 : index
    %c0_18 = arith.constant 0 : index
    %23 = vector.load %arg8[%c0_17, %c0_18] : memref<8x128xf32, #tpu.memory_space<vmem>>, vector<8x128xf32>
    tpu.vector_store %arg8[%c0_17, %c0_18], %22 {strides = array<i32>} : memref<8x128xf32, #tpu.memory_space<vmem>>, vector<8x128xf32>,
    return
  }
  func.func @transform_0(%arg0: i32) -> (i32, i32) {
    %c0_i32 = arith.constant 0 : i32
    %c0_i32_0 = arith.constant 0 : i32
    return %arg0, %c0_i32 : i32, i32
  }
  func.func @transform_1(%arg0: i32) -> (i32, i32) {
    %c0_i32 = arith.constant 0 : i32
    %c0_i32_0 = arith.constant 0 : i32
    %c0_i32_1 = arith.constant 0 : i32
    return %c0_i32, %c0_i32_0 : i32, i32
  }
  func.func @transform_2(%arg0: i32) -> (i32, i32) {
    %c0_i32 = arith.constant 0 : i32
    %c0_i32_0 = arith.constant 0 : i32
    %c0_i32_1 = arith.constant 0 : i32
    return %c0_i32, %c0_i32_0 : i32, i32
  }
  func.func @transform_3(%arg0: i32) -> (i32, i32) {
    %c0_i32 = arith.constant 0 : i32
    %c0_i32_0 = arith.constant 0 : i32
    %c0_i32_1 = arith.constant 0 : i32
    return %c0_i32, %c0_i32_0 : i32, i32
  }
  func.func @transform_4(%arg0: i32) -> (i32, i32) {
    %c0_i32 = arith.constant 0 : i32
    %c0_i32_0 = arith.constant 0 : i32
    %c0_i32_1 = arith.constant 0 : i32
    return %c0_i32, %c0_i32_0 : i32, i32
  }
  func.func @transform_5(%arg0: i32) -> (i32, i32) {
    %c0_i32 = arith.constant 0 : i32
    %c0_i32_0 = arith.constant 0 : i32
    %c0_i32_1 = arith.constant 0 : i32
    return %c0_i32, %c0_i32_0 : i32, i32
  }
  func.func @transform_6(%arg0: i32) -> (i32, i32) {
    %c0_i32 = arith.constant 0 : i32
    %c0_i32_0 = arith.constant 0 : i32
    %c0_i32_1 = arith.constant 0 : i32
    return %c0_i32, %c0_i32_0 : i32, i32
  }
  func.func @transform_7(%arg0: i32) -> (i32, i32) {
    %c0_i32 = arith.constant 0 : i32
    %c0_i32_0 = arith.constant 0 : i32
    return %arg0, %c0_i32 : i32, i32
  }
}

</mosaic_0001>

<llo_original>
// kernel: dqn_forward.1
$region0: #{dqn_forward.1}
  #allocation0 [shape = 'u32[]', space=smem, size = 0x4, offset = 0x4, fixed_abs, tag = 'smem constant byte address 0x4 - core index']
  #allocation1 [shape = 'u32[72,128]{1,0:T(1,128)}', space=vmem, size = 0x9000, scoped, tag = 'internal scratch']
  %s0 = inlined_call_operand.vmem [shape: f32[8,4], index: 0, kind: input, shape index: {}]
  %s1 = inlined_call_operand.vmem [shape: bf16[4,128], index: 1, kind: input, shape index: {}]
  %s2 = inlined_call_operand.vmem [shape: f32[1,128], index: 2, kind: input, shape index: {}]
  %s3 = inlined_call_operand.hbm [shape: bf16[128,128], index: 3, kind: input, shape index: {}]
  %s4 = inlined_call_operand.vmem [shape: f32[1,128], index: 4, kind: input, shape index: {}]
  %s5 = inlined_call_operand.hbm [shape: bf16[128,128], index: 5, kind: input, shape index: {}]
  %s6 = inlined_call_operand.vmem [shape: f32[1,128], index: 6, kind: input, shape index: {}]
  %s7 = inlined_call_operand.vmem [shape: f32[8,128], index: 7, kind: output, shape index: {}]
  %s8 = sld [smem:[#allocation0]]
  $region46: #{dqn_forward.1} parent=0
    _
  %s10 = ssub.s32 1, %s8
  %s11 = scalar_select 0, %s10, %s8
  $region1: #{dqn_forward.1} parent=0
    #allocation2 [shape = 'u8[32768]{0}', space=vmem, size = 0x8000, scoped, tag = 'input window, operand 3, single buffered']
    #allocation3 [shape = 's32[1]{0}', space=sflag, size = 0x4, scoped, tag = 'scoped memory for dqn_forward.1']
    #allocation4 [shape = 'u8[32768]{0}', space=vmem, size = 0x8000, scoped, tag = 'input window, operand 5, single buffered']
    #allocation5 [shape = 's32[1]{0}', space=sflag, size = 0x4, scoped, tag = 'scoped memory for dqn_forward.1']
    %12 = vsyncpa [#allocation3], 0
    %13 = vsyncpa [#allocation5], 0
    // Predicated region
    $region2: #{dqn_forward.1} parent=1 // pred_check
      _
    $region3: #{dqn_forward.1} parent=1 // pred_check_branch
      %15 = sbr.rel (0) target = $region5
    $region4: #{dqn_forward.1} parent=1 // pred_region
      _
    $region5: #{dqn_forward.1} parent=1 // pred_fallthru
      _
    // Predicated region
    $region6: #{dqn_forward.1} parent=1 // pred_check
      _
    $region7: #{dqn_forward.1} parent=1 // pred_check_branch
      %17 = sbr.rel (0) target = $region9
    $region8: #{dqn_forward.1} parent=1 // pred_region
      _
    $region9: #{dqn_forward.1} parent=1 // pred_fallthru
      _
    // Predicated region
    $region10: #{dqn_forward.1} parent=1 // pred_check
      _
    $region11: #{dqn_forward.1} parent=1 // pred_check_branch
      %19 = sbr.rel (0) target = $region13
    $region12: #{dqn_forward.1} parent=1 // pred_region
      _
    $region13: #{dqn_forward.1} parent=1 // pred_fallthru
      _
    // Predicated region
    $region14: #{dqn_forward.1} parent=1 // pred_check
      _
    $region15: #{dqn_forward.1} parent=1 // pred_check_branch
      %21 = sbr.rel (0) target = $region17
    $region16: #{dqn_forward.1} parent=1 // pred_region
      %23 = vsyncadd [#allocation3], 0
      %s24 = sshll.u32 %s3, 4
      %s25 = int_to_ptr.hbm [resolvable:$true] %s24
      %s26 = sshll.u32 [#allocation2], 4
      %s27 = int_to_ptr.vmem [resolvable:$true] %s26
      %32 = dma.hbm_to_vmem [thread:$0]  %s25, 1024, %s27, [#allocation3], 64, 64, 4
    $region17: #{dqn_forward.1} parent=1 // pred_fallthru
      _
    // Predicated region
    $region18: #{dqn_forward.1} parent=1 // pred_check
      _
    $region19: #{dqn_forward.1} parent=1 // pred_check_branch
      %34 = sbr.rel (0) target = $region21
    $region20: #{dqn_forward.1} parent=1 // pred_region
      _
    $region21: #{dqn_forward.1} parent=1 // pred_fallthru
      _
    // Predicated region
    $region22: #{dqn_forward.1} parent=1 // pred_check
      _
    $region23: #{dqn_forward.1} parent=1 // pred_check_branch
      %36 = sbr.rel (0) target = $region25
    $region24: #{dqn_forward.1} parent=1 // pred_region
      %38 = vsyncadd [#allocation5], 0
      %s39 = sshll.u32 %s5, 4
      %s40 = int_to_ptr.hbm [resolvable:$true] %s39
      %s41 = sshll.u32 [#allocation4], 4
      %s42 = int_to_ptr.vmem [resolvable:$true] %s41
      %47 = dma.hbm_to_vmem [thread:$0]  %s40, 1024, %s42, [#allocation5], 64, 64, 4
    $region25: #{dqn_forward.1} parent=1 // pred_fallthru
      _
    // Predicated region
    $region26: #{dqn_forward.1} parent=1 // pred_check
      _
    $region27: #{dqn_forward.1} parent=1 // pred_check_branch
      %49 = sbr.rel (0) target = $region29
    $region28: #{dqn_forward.1} parent=1 // pred_region
      _
    $region29: #{dqn_forward.1} parent=1 // pred_fallthru
      _
    // Predicated region
    $region30: #{dqn_forward.1} parent=1 // pred_check
      _
    $region31: #{dqn_forward.1} parent=1 // pred_check_branch
      %51 = sbr.rel (0) target = $region33
    $region32: #{dqn_forward.1} parent=1 // pred_region
      %53 = dma.done [#allocation3], 1024
    $region33: #{dqn_forward.1} parent=1 // pred_fallthru
      _
    // Predicated region
    $region34: #{dqn_forward.1} parent=1 // pred_check
      _
    $region35: #{dqn_forward.1} parent=1 // pred_check_branch
      %55 = sbr.rel (0) target = $region37
    $region36: #{dqn_forward.1} parent=1 // pred_region
      %57 = dma.done [#allocation5], 1024
    $region37: #{dqn_forward.1} parent=1 // pred_fallthru
      _
    %v59 = vld [vmem:[%s1] sm:$0x3]
    %v60 = vld [vmem:[%s2] sm:$0x1]
    %v61 = vld [vmem:[#allocation2] sm:$0xf]
    %v62 = vld [vmem:[#allocation2 + $0x4] sm:$0xf]
    %v63 = vld [vmem:[#allocation2 + $0x8] sm:$0xf]
    %v64 = vld [vmem:[#allocation2 + $0xc] sm:$0xf]
    %v65 = vld [vmem:[#allocation2 + $0x10] sm:$0xf]
    %v66 = vld [vmem:[#allocation2 + $0x14] sm:$0xf]
    %v67 = vld [vmem:[#allocation2 + $0x18] sm:$0xf]
    %v68 = vld [vmem:[#allocation2 + $0x1c] sm:$0xf]
    %v69 = vld [vmem:[#allocation2 + $0x20] sm:$0xf]
    %v70 = vld [vmem:[#allocation2 + $0x24] sm:$0xf]
    %v71 = vld [vmem:[#allocation2 + $0x28] sm:$0xf]
    %v72 = vld [vmem:[#allocation2 + $0x2c] sm:$0xf]
    %v73 = vld [vmem:[#allocation2 + $0x30] sm:$0xf]
    %v74 = vld [vmem:[#allocation2 + $0x34] sm:$0xf]
    %v75 = vld [vmem:[#allocation2 + $0x38] sm:$0xf]
    %v76 = vld [vmem:[#allocation2 + $0x3c] sm:$0xf]
    %v77 = vld [vmem:[%s4] sm:$0x1]
    %v78 = vld [vmem:[#allocation4] sm:$0xf]
    %v79 = vld [vmem:[#allocation4 + $0x4] sm:$0xf]
    %v80 = vld [vmem:[#allocation4 + $0x8] sm:$0xf]
    %v81 = vld [vmem:[#allocation4 + $0xc] sm:$0xf]
    %v82 = vld [vmem:[#allocation4 + $0x10] sm:$0xf]
    %v83 = vld [vmem:[#allocation4 + $0x14] sm:$0xf]
    %v84 = vld [vmem:[#allocation4 + $0x18] sm:$0xf]
    %v85 = vld [vmem:[#allocation4 + $0x1c] sm:$0xf]
    %v86 = vld [vmem:[#allocation4 + $0x20] sm:$0xf]
    %v87 = vld [vmem:[#allocation4 + $0x24] sm:$0xf]
    %v88 = vld [vmem:[#allocation4 + $0x28] sm:$0xf]
    %v89 = vld [vmem:[#allocation4 + $0x2c] sm:$0xf]
    %v90 = vld [vmem:[#allocation4 + $0x30] sm:$0xf]
    %v91 = vld [vmem:[#allocation4 + $0x34] sm:$0xf]
    %v92 = vld [vmem:[#allocation4 + $0x38] sm:$0xf]
    %v93 = vld [vmem:[#allocation4 + $0x3c] sm:$0xf]
    %v94 = vld [vmem:[%s6] sm:$0x1]
    %v95 = vld [vmem:[%s0] sm:$0xff]
    %v96 = vpack.c.bf16 %v95, %v95
    %v98 = vperm.slane %v60, 0
    %vm100 = vcmask 31744
    %v102 = vsel %vm100, %v96, 0
    %vm104 = vcmask 1041408
    %v106 = vsel %vm104, %v59, 0
    %108 = vmatpush.bf16.msra.mxu0 0
    %109 = vmatpush.bf16.msra.mxu0 0
    %110 = vmatpush.bf16.msra.mxu0 0
    %111 = vmatpush.bf16.msra.mxu0 0
    %112 = vmatpush.bf16.msra.mxu0 0
    %113 = vmatpush.bf16.msra.mxu0 0
    %114 = vmatpush.bf16.msra.mxu0 0
    %115 = vmatpush.bf16.msra.mxu0 %v106
    %116 = vmatmul.bf16.gmra.mxu0 %v102
    %v117 = vpop.f32.mrf.mxu0
    %v118 = vadd.f32 %v98, %v117
    %v119 = vpop.f32.mrf.mxu0
    %120 = vdwg.mxu0
    %v121 = vmax.f32 %v118, 0.0
    %v122 = vpack.c.bf16 %v121, %v121
    %v124 = vperm.slane %v77, 0
    %v142 = vunpack.c.l.b16 %v61
    %v143 = vunpack.c.l.b16 %v62
    %v144 = vunpack.c.l.b16 %v63
    %v145 = vunpack.c.l.b16 %v64
    %v146 = vunpack.c.l.b16 %v65
    %v147 = vunpack.c.l.b16 %v66
    %v148 = vunpack.c.l.b16 %v67
    %v149 = vunpack.c.l.b16 %v68
    %v150 = vunpack.c.l.b16 %v69
    %v151 = vunpack.c.l.b16 %v70
    %v152 = vunpack.c.l.b16 %v71
    %v153 = vunpack.c.l.b16 %v72
    %v154 = vunpack.c.l.b16 %v73
    %v155 = vunpack.c.l.b16 %v74
    %v156 = vunpack.c.l.b16 %v75
    %v157 = vunpack.c.l.b16 %v76
    %v158 = vpack.c.b16 %v143, %v142
    %v159 = vpack.c.b16 %v145, %v144
    %v160 = vpack.c.b16 %v147, %v146
    %v161 = vpack.c.b16 %v149, %v148
    %v162 = vpack.c.b16 %v151, %v150
    %v163 = vpack.c.b16 %v153, %v152
    %v164 = vpack.c.b16 %v155, %v154
    %v165 = vpack.c.b16 %v157, %v156
    %174 = vmatpush.bf16.msra.mxu0 %v165
    %175 = vmatpush.bf16.msra.mxu0 %v164
    %176 = vmatpush.bf16.msra.mxu0 %v163
    %177 = vmatpush.bf16.msra.mxu0 %v162
    %178 = vmatpush.bf16.msra.mxu0 %v161
    %179 = vmatpush.bf16.msra.mxu0 %v160
    %180 = vmatpush.bf16.msra.mxu0 %v159
    %181 = vmatpush.bf16.msra.mxu0 %v158
    %182 = vmatmul.bf16.gmra.mxu0 %v122
    %v183 = vpop.f32.mrf.mxu0
    %v184 = vadd.f32 %v124, %v183
    %v185 = vpop.f32.mrf.mxu0
    %186 = vdwg.mxu0
    %v187 = vmax.f32 %v184, 0.0
    %v188 = vpack.c.bf16 %v187, %v187
    %v190 = vperm.slane %v94, 0
    %v208 = vunpack.c.l.b16 %v78
    %v209 = vunpack.c.l.b16 %v79
    %v210 = vunpack.c.l.b16 %v80
    %v211 = vunpack.c.l.b16 %v81
    %v212 = vunpack.c.l.b16 %v82
    %v213 = vunpack.c.l.b16 %v83
    %v214 = vunpack.c.l.b16 %v84
    %v215 = vunpack.c.l.b16 %v85
    %v216 = vunpack.c.l.b16 %v86
    %v217 = vunpack.c.l.b16 %v87
    %v218 = vunpack.c.l.b16 %v88
    %v219 = vunpack.c.l.b16 %v89
    %v220 = vunpack.c.l.b16 %v90
    %v221 = vunpack.c.l.b16 %v91
    %v222 = vunpack.c.l.b16 %v92
    %v223 = vunpack.c.l.b16 %v93
    %v224 = vpack.c.b16 %v209, %v208
    %v225 = vpack.c.b16 %v211, %v210
    %v226 = vpack.c.b16 %v213, %v212
    %v227 = vpack.c.b16 %v215, %v214
    %v228 = vpack.c.b16 %v217, %v216
    %v229 = vpack.c.b16 %v219, %v218
    %v230 = vpack.c.b16 %v221, %v220
    %v231 = vpack.c.b16 %v223, %v222
    %240 = vmatpush.bf16.msra.mxu0 %v231
    %241 = vmatpush.bf16.msra.mxu0 %v230
    %242 = vmatpush.bf16.msra.mxu0 %v229
    %243 = vmatpush.bf16.msra.mxu0 %v228
    %244 = vmatpush.bf16.msra.mxu0 %v227
    %245 = vmatpush.bf16.msra.mxu0 %v226
    %246 = vmatpush.bf16.msra.mxu0 %v225
    %247 = vmatpush.bf16.msra.mxu0 %v224
    %248 = vmatmul.bf16.gmra.mxu0 %v188
    %v249 = vpop.f32.mrf.mxu0
    %v250 = vadd.f32 %v190, %v249
    %v251 = vpop.f32.mrf.mxu0
    %252 = vdwg.mxu0
    %253 = vst [vmem:[%s7] sm:$0xff] %v250
    // Predicated region
    $region38: #{dqn_forward.1} parent=1 // pred_check
      _
    $region39: #{dqn_forward.1} parent=1 // pred_check_branch
      %255 = sbr.rel (0) target = $region41
    $region40: #{dqn_forward.1} parent=1 // pred_region
      _
    $region41: #{dqn_forward.1} parent=1 // pred_fallthru
      _
    // Predicated region
    $region42: #{dqn_forward.1} parent=1 // pred_check
      _
    $region43: #{dqn_forward.1} parent=1 // pred_check_branch
      %257 = sbr.rel (0) target = $region45
    $region44: #{dqn_forward.1} parent=1 // pred_region
      _
    $region45: #{dqn_forward.1} parent=1 // pred_fallthru
      _
    %258 = vsyncpa [#allocation3], 1
    %259 = vsyncpa [#allocation5], 1

</llo_original>
